<compile_context>
chip_gen: v5e
topology: v5e:2x2
jax: 0.10.0
libtpu: 0.0.40
codegen_flags: <defaults>
</compile_context>

<pallas_src>
import jax
import jax.numpy as jnp
from jax.experimental import pallas as pl
from jax.experimental.pallas import tpu as pltpu

_LANE = 128


def _res_attn_kernel(x0_ref, x1_ref, w0_ref, w1_ref, wf_ref, sh_ref, o_ref):
    # x0_ref / x1_ref / o_ref blocks: (1, C, Lt) with Lt lane-dense.
    x0 = x0_ref[0]            # (C, Lt)
    x1 = x1_ref[0]            # (C, Lt)
    w0 = w0_ref[...]          # (C, C)  BN0-folded conv0 weight
    w1 = w1_ref[...]          # (C, C)  BN1-folded conv1 weight
    wf = wf_ref[...]          # (C, C)  final conv weight
    sh = sh_ref[...]          # (C, 1)  combined BN shift (lane broadcast, emitted once)

    y = (jnp.dot(w0, x0, preferred_element_type=jnp.float32)
         + jnp.dot(w1, x1, preferred_element_type=jnp.float32)
         + sh)
    z = jnp.maximum(y, 0.0)                                   # ReLU
    r = jnp.dot(wf, z, preferred_element_type=jnp.float32)
    o_ref[0] = (r * x0).astype(o_ref.dtype)                   # * x0 (residual attention)


def residual_attention_forward(x0, x1, params):
    """Forward of residual_attention_layer (kernel_size=1, bias=False, ReLU).

    x0, x1 : (B, C, H, W) float32 (PyTorch NCHW layout).
    params : (w0, w1, wf, g0, b0, m0, v0, g1, b1, m1, v1) with conv weights of
             shape (C, C, 1, 1) and per-channel BN parameters of shape (C,).
    """
    (w0, w1, wf, g0, b0, m0, v0, g1, b1, m1, v1) = params
    B, C, H, W = x0.shape
    L = H * W
    eps = 1e-5

    # Fold eval-mode BatchNorm into the 1x1 conv weights + a per-channel shift.
    s0 = g0 / jnp.sqrt(v0 + eps)
    s1 = g1 / jnp.sqrt(v1 + eps)
    w0f = (s0[:, None] * w0[:, :, 0, 0]).astype(jnp.float32)       # (C, C)
    w1f = (s1[:, None] * w1[:, :, 0, 0]).astype(jnp.float32)       # (C, C)
    wff = wf[:, :, 0, 0].astype(jnp.float32)                       # (C, C)
    sh = ((b0 - m0 * s0) + (b1 - m1 * s1)).reshape(C, 1).astype(jnp.float32)

    # Free, contiguous reshape -> lane-dense minor dim (no HBM transpose pass),
    # padded to a multiple of 128 lanes so the output stores are unmasked.
    x0r = x0.reshape(B, C, L).astype(jnp.float32)
    x1r = x1.reshape(B, C, L).astype(jnp.float32)
    Lp = ((L + _LANE - 1) // _LANE) * _LANE
    if Lp != L:
        pad = ((0, 0), (0, 0), (0, Lp - L))
        x0r = jnp.pad(x0r, pad)     # padded x0 lanes are 0 -> padded output is 0
        x1r = jnp.pad(x1r, pad)

    # Spatial tile Lt: multiple of 128, block bytes <= ~2 MiB per array so the
    # double-buffered footprint (2 inputs + 1 output) stays ~12 MiB (fits the
    # 32 MiB scoped limit and v7x's 64 MiB physical VMEM), divides Lp.
    block_budget_bytes = 2 * 1024 * 1024
    lt = (block_budget_bytes // (C * 4)) // _LANE * _LANE
    lt = max(_LANE, min(lt, Lp))
    while Lp % lt != 0:
        lt -= _LANE

    out = pl.pallas_call(
        _res_attn_kernel,
        out_shape=jax.ShapeDtypeStruct((B, C, Lp), jnp.float32),
        grid_spec=pltpu.PrefetchScalarGridSpec(
            num_scalar_prefetch=0,
            grid=(B, Lp // lt),
            in_specs=[
                pl.BlockSpec((1, C, lt), lambda b, l: (b, 0, l)),  # x0
                pl.BlockSpec((1, C, lt), lambda b, l: (b, 0, l)),  # x1
                pl.BlockSpec((C, C), lambda b, l: (0, 0)),         # conv0 weight (BN-folded)
                pl.BlockSpec((C, C), lambda b, l: (0, 0)),         # conv1 weight (BN-folded)
                pl.BlockSpec((C, C), lambda b, l: (0, 0)),         # final conv weight
                pl.BlockSpec((C, 1), lambda b, l: (0, 0)),         # combined BN shift
            ],
            out_specs=pl.BlockSpec((1, C, lt), lambda b, l: (b, 0, l)),
        ),
        compiler_params=pltpu.CompilerParams(
            dimension_semantics=("parallel", "parallel"),
            vmem_limit_bytes=32 * 1024 * 1024),
    )(x0r, x1r, w0f, w1f, wff, sh)

    return out[:, :, :L].reshape(B, C, H, W)


def _reference(x0, x1, params):
    """Pure-JAX reference of the PyTorch forward (eval-mode BatchNorm)."""
    (w0, w1, wf, g0, b0, m0, v0, g1, b1, m1, v1) = params
    eps = 1e-5

    def conv1x1(x, w):
        return jnp.einsum('oi,bihw->bohw', w[:, :, 0, 0], x)

    def bn(y, g, b, m, v):
        return ((y - m[None, :, None, None])
                / jnp.sqrt(v[None, :, None, None] + eps)
                * g[None, :, None, None] + b[None, :, None, None])

    y0 = bn(conv1x1(x0, w0), g0, b0, m0, v0)
    y1 = bn(conv1x1(x1, w1), g1, b1, m1, v1)
    z = jnp.maximum(y0 + y1, 0.0)
    r = conv1x1(z, wf)
    return r * x0


if __name__ == "__main__":
    B, C, H, W = 2, 4, 16, 16

    key = jax.random.PRNGKey(0)
    ks = jax.random.split(key, 13)
    x0 = jax.random.normal(ks[0], (B, C, H, W), jnp.float32)
    x1 = jax.random.normal(ks[1], (B, C, H, W), jnp.float32)

    w0 = jax.random.normal(ks[2], (C, C, 1, 1), jnp.float32) * 0.3
    w1 = jax.random.normal(ks[3], (C, C, 1, 1), jnp.float32) * 0.3
    wf = jax.random.normal(ks[4], (C, C, 1, 1), jnp.float32) * 0.3

    g0 = 1.0 + 0.1 * jax.random.normal(ks[5], (C,), jnp.float32)
    b0 = 0.1 * jax.random.normal(ks[6], (C,), jnp.float32)
    m0 = 0.1 * jax.random.normal(ks[7], (C,), jnp.float32)
    v0 = 1.0 + 0.1 * jax.random.uniform(ks[8], (C,), jnp.float32)
    g1 = 1.0 + 0.1 * jax.random.normal(ks[9], (C,), jnp.float32)
    b1 = 0.1 * jax.random.normal(ks[10], (C,), jnp.float32)
    m1 = 0.1 * jax.random.normal(ks[11], (C,), jnp.float32)
    v1 = 1.0 + 0.1 * jax.random.uniform(ks[12], (C,), jnp.float32)

    params = (w0, w1, wf, g0, b0, m0, v0, g1, b1, m1, v1)

    out = residual_attention_forward(x0, x1, params)
    out = jax.block_until_ready(out)

    ref = _reference(x0, x1, params)
    err = float(jnp.max(jnp.abs(out - ref)))
    if err > 1e-3:
        raise AssertionError(f"Pallas residual_attention mismatch, max abs err = {err}")
    print("KERNEL_OK")
</pallas_src>

<mosaic_0001>
module attributes {stable_mosaic.version = 11 : i64} {
  func.func @_res_attn_kernel(%arg0: i32, %arg1: i32, %arg2: memref<1x4x256xf32, #tpu.memory_space<vmem>>, %arg3: memref<1x4x256xf32, #tpu.memory_space<vmem>>, %arg4: memref<4x4xf32, #tpu.memory_space<vmem>>, %arg5: memref<4x4xf32, #tpu.memory_space<vmem>>, %arg6: memref<4x4xf32, #tpu.memory_space<vmem>>, %arg7: memref<4x1xf32, #tpu.memory_space<vmem>>, %arg8: memref<1x4x256xf32, #tpu.memory_space<vmem>>) attributes {dimension_semantics = [#tpu.dimension_semantics<parallel>, #tpu.dimension_semantics<parallel>], iteration_bounds = array<i64: 2, 1>, scalar_prefetch = 0 : i64, scratch_operands = 0 : i64, tpu.core_type = #tpu.core_type<tc>, window_params = [{transform_indices = @transform_0, window_bounds = array<i64: 1, 4, 256>}, {transform_indices = @transform_1, window_bounds = array<i64: 1, 4, 256>}, {pipeline_mode = #tpu.pipeline_mode<synchronous>, transform_indices = @transform_2, window_bounds = array<i64: 4, 4>}, {pipeline_mode = #tpu.pipeline_mode<synchronous>, transform_indices = @transform_3, window_bounds = array<i64: 4, 4>}, {pipeline_mode = #tpu.pipeline_mode<synchronous>, transform_indices = @transform_4, window_bounds = array<i64: 4, 4>}, {pipeline_mode = #tpu.pipeline_mode<synchronous>, transform_indices = @transform_5, window_bounds = array<i64: 4, 1>}, {transform_indices = @transform_6, window_bounds = array<i64: 1, 4, 256>}]} {
    %c0 = arith.constant 0 : index
    %c0_0 = arith.constant 0 : index
    %c0_1 = arith.constant 0 : index
    %0 = vector.load %arg2[%c0, %c0_0, %c0_1] : memref<1x4x256xf32, #tpu.memory_space<vmem>>, vector<1x4x256xf32>
    %1 = vector.shape_cast %0 : vector<1x4x256xf32> to vector<4x256xf32>
    %c0_2 = arith.constant 0 : index
    %c0_3 = arith.constant 0 : index
    %c0_4 = arith.constant 0 : index
    %2 = vector.load %arg3[%c0_2, %c0_3, %c0_4] : memref<1x4x256xf32, #tpu.memory_space<vmem>>, vector<1x4x256xf32>
    %3 = vector.shape_cast %2 : vector<1x4x256xf32> to vector<4x256xf32>
    %c0_5 = arith.constant 0 : index
    %c0_6 = arith.constant 0 : index
    %4 = vector.load %arg4[%c0_5, %c0_6] : memref<4x4xf32, #tpu.memory_space<vmem>>, vector<4x4xf32>
    %c0_7 = arith.constant 0 : index
    %c0_8 = arith.constant 0 : index
    %5 = vector.load %arg5[%c0_7, %c0_8] : memref<4x4xf32, #tpu.memory_space<vmem>>, vector<4x4xf32>
    %c0_9 = arith.constant 0 : index
    %c0_10 = arith.constant 0 : index
    %6 = vector.load %arg6[%c0_9, %c0_10] : memref<4x4xf32, #tpu.memory_space<vmem>>, vector<4x4xf32>
    %c0_11 = arith.constant 0 : index
    %c0_12 = arith.constant 0 : index
    %7 = vector.load %arg7[%c0_11, %c0_12] : memref<4x1xf32, #tpu.memory_space<vmem>>, vector<4x1xf32>
    %cst = arith.constant dense<0.000000e+00> : vector<4x256xf32>
    %8 = tpu.matmul %4, %1, %cst {dimension_numbers = #tpu.dot_dimension_numbers<[1], [0], [0], [1], [0, 0, 1, 1], [], []>} : vector<4x4xf32>, vector<4x256xf32>, vector<4x256xf32> -> vector<4x256xf32>
    %cst_13 = arith.constant dense<0.000000e+00> : vector<4x256xf32>
    %9 = tpu.matmul %5, %3, %cst_13 {dimension_numbers = #tpu.dot_dimension_numbers<[1], [0], [0], [1], [0, 0, 1, 1], [], []>} : vector<4x4xf32>, vector<4x256xf32>, vector<4x256xf32> -> vector<4x256xf32>
    %10 = arith.addf %8, %9 : vector<4x256xf32>
    %11 = vector.broadcast %7 : vector<4x1xf32> to vector<4x256xf32>
    %12 = arith.addf %10, %11 : vector<4x256xf32>
    %cst_14 = arith.constant 0.000000e+00 : f32
    %13 = vector.broadcast %cst_14 : f32 to vector<4x256xf32>
    %14 = arith.maximumf %12, %13 : vector<4x256xf32>
    %cst_15 = arith.constant dense<0.000000e+00> : vector<4x256xf32>
    %15 = tpu.matmul %6, %14, %cst_15 {dimension_numbers = #tpu.dot_dimension_numbers<[1], [0], [0], [1], [0, 0, 1, 1], [], []>} : vector<4x4xf32>, vector<4x256xf32>, vector<4x256xf32> -> vector<4x256xf32>
    %16 = arith.mulf %15, %1 : vector<4x256xf32>
    %c0_16 = arith.constant 0 : index
    %c0_17 = arith.constant 0 : index
    %c0_18 = arith.constant 0 : index
    %17 = vector.load %arg8[%c0_16, %c0_17, %c0_18] : memref<1x4x256xf32, #tpu.memory_space<vmem>>, vector<1x4x256xf32>
    %18 = vector.shape_cast %17 : vector<1x4x256xf32> to vector<4x256xf32>
    %19 = vector.shape_cast %16 : vector<4x256xf32> to vector<1x4x256xf32>
    tpu.vector_store %arg8[%c0_16, %c0_17, %c0_18], %19 {strides = array<i32>} : memref<1x4x256xf32, #tpu.memory_space<vmem>>, vector<1x4x256xf32>,
    return
  }
  func.func @transform_0(%arg0: i32, %arg1: i32) -> (i32, i32, i32) {
    %c0_i32 = arith.constant 0 : i32
    %c0_i32_0 = arith.constant 0 : i32
    return %arg0, %c0_i32, %arg1 : i32, i32, i32
  }
  func.func @transform_1(%arg0: i32, %arg1: i32) -> (i32, i32, i32) {
    %c0_i32 = arith.constant 0 : i32
    %c0_i32_0 = arith.constant 0 : i32
    return %arg0, %c0_i32, %arg1 : i32, i32, i32
  }
  func.func @transform_2(%arg0: i32, %arg1: i32) -> (i32, i32) {
    %c0_i32 = arith.constant 0 : i32
    %c0_i32_0 = arith.constant 0 : i32
    %c0_i32_1 = arith.constant 0 : i32
    return %c0_i32, %c0_i32_0 : i32, i32
  }
  func.func @transform_3(%arg0: i32, %arg1: i32) -> (i32, i32) {
    %c0_i32 = arith.constant 0 : i32
    %c0_i32_0 = arith.constant 0 : i32
    %c0_i32_1 = arith.constant 0 : i32
    return %c0_i32, %c0_i32_0 : i32, i32
  }
  func.func @transform_4(%arg0: i32, %arg1: i32) -> (i32, i32) {
    %c0_i32 = arith.constant 0 : i32
    %c0_i32_0 = arith.constant 0 : i32
    %c0_i32_1 = arith.constant 0 : i32
    return %c0_i32, %c0_i32_0 : i32, i32
  }
  func.func @transform_5(%arg0: i32, %arg1: i32) -> (i32, i32) {
    %c0_i32 = arith.constant 0 : i32
    %c0_i32_0 = arith.constant 0 : i32
    %c0_i32_1 = arith.constant 0 : i32
    return %c0_i32, %c0_i32_0 : i32, i32
  }
  func.func @transform_6(%arg0: i32, %arg1: i32) -> (i32, i32, i32) {
    %c0_i32 = arith.constant 0 : i32
    %c0_i32_0 = arith.constant 0 : i32
    return %arg0, %c0_i32, %arg1 : i32, i32, i32
  }
}

</mosaic_0001>

<llo_original>
// kernel: tpu_custom_call.1
$region0: #{tpu_custom_call.1}
  #allocation0 [shape = 'u32[]', space=smem, size = 0x4, offset = 0x4, fixed_abs, tag = 'smem constant byte address 0x4 - core index']
  #allocation1 [shape = 'u32[72,128]{1,0:T(1,128)}', space=vmem, size = 0x9000, scoped, tag = 'internal scratch']
  %s0 = inlined_call_operand.hbm [shape: f32[2,4,256], index: 0, kind: input, shape index: {}]
  %s1 = inlined_call_operand.hbm [shape: f32[2,4,256], index: 1, kind: input, shape index: {}]
  %s2 = inlined_call_operand.vmem [shape: f32[4,4], index: 2, kind: input, shape index: {}]
  %s3 = inlined_call_operand.hbm [shape: f32[4,4], index: 3, kind: input, shape index: {}]
  %s4 = inlined_call_operand.hbm [shape: f32[4,4], index: 4, kind: input, shape index: {}]
  %s5 = inlined_call_operand.vmem [shape: f32[4,1], index: 5, kind: input, shape index: {}]
  %s6 = inlined_call_operand.hbm [shape: f32[2,4,256], index: 6, kind: output, shape index: {}]
  %s7 = sld [smem:[#allocation0]]
  $region73: #{tpu_custom_call.1} parent=0
    _
  %s9 = ssub.s32 1, %s7
  %s10 = scalar_select 0, %s9, %s7
  $region1: #{tpu_custom_call.1} parent=0
    #allocation2 [shape = 'u8[8192]{0}', space=vmem, size = 0x2000, scoped, tag = 'input window, operand 0']
    #allocation3 [shape = 's32[2]{0}', space=sflag, size = 0x8, scoped, tag = 'scoped memory for tpu_custom_call.1']
    #allocation4 [shape = 's32[2]{0}', space=sflag, size = 0x8, scoped, tag = 'scoped memory for tpu_custom_call.1']
    #allocation5 [shape = 'u8[8192]{0}', space=vmem, size = 0x2000, scoped, tag = 'input window, operand 1']
    #allocation6 [shape = 's32[2]{0}', space=sflag, size = 0x8, scoped, tag = 'scoped memory for tpu_custom_call.1']
    #allocation7 [shape = 'u8[2048]{0}', space=vmem, size = 0x800, scoped, tag = 'input window, operand 3, single buffered']
    #allocation8 [shape = 'u8[2048]{0}', space=vmem, size = 0x800, scoped, tag = 'input window, operand 4, single buffered']
    #allocation9 [shape = 's32[1]{0}', space=sflag, size = 0x4, scoped, tag = 'scoped memory for tpu_custom_call.1']
    #allocation10 [shape = 'u8[8192]{0}', space=vmem, size = 0x2000, scoped, tag = 'output window, operand 0']
    %11 = vsyncpa [#allocation3], 0
    %s12 = scalar_lea.sflag [#allocation3], 1
    %13 = vsyncpa %s12, 0
    %14 = vsyncpa [#allocation6], 0
    %s15 = scalar_lea.sflag [#allocation6], 1
    %16 = vsyncpa %s15, 0
    %17 = vsyncpa [#allocation9], 0
    %18 = vsyncpa [#allocation4], 0
    %s19 = scalar_lea.sflag [#allocation4], 1
    %20 = vsyncpa %s19, 0
    loop: start=0, step=1, limit=4
    $region2: #{tpu_custom_call.1} parent=1 // loop_pre_header
      _
    $region3: #{tpu_custom_call.1} parent=1 // loop_header
      %s22 = sphi 0, %s26
      %p23 = scmp.ge.s32.totalorder %s22, 4
      %s29 = sphi 0, %s41
      %s30 = sphi 0, %s37
      %s31 = sphi 0, %s29
      %s32 = sphi 0, %s30
      %s33 = sphi 0, %s31
      %s34 = sphi 0, %s32
      %s46 = sphi 0, %s48
      %s49 = sphi 0, %s46
      %s50 = sphi 0, %s49
      %s66 = sphi 0, %s50
      %s74 = sphi 0, %s76
      %s77 = sphi 0, %s74
      %s78 = sphi 0, %s77
      %s94 = sphi 0, %s78
      %s98 = sphi 0, %s98
      %s100 = sphi 0, %s98
      %s101 = sphi 0, %s100
      %s115 = sphi 0, %s101
      %s119 = sphi 0, %s119
      %s121 = sphi 0, %s119
      %s122 = sphi 0, %s121
      %s136 = sphi 0, %s122
      %s140 = sphi 0, %s140
      %s142 = sphi 0, %s140
      %s143 = sphi 0, %s142
      %s157 = sphi 0, %s143
      %s161 = sphi 0, %s161
      %s163 = sphi 0, %s161
      %s164 = sphi 0, %s163
      %s178 = sphi 0, %s164
      %s186 = sphi 0, %s188
      %s189 = sphi 0, %s186
      %s190 = sphi 0, %s189
      %s206 = sphi 0, %s190
    $region4: #{tpu_custom_call.1} parent=1 // loop_header_branch
      %25 = sbr.rel (%p23) target = $region8
    $region5: #{tpu_custom_call.1} parent=1 // loop_body
      %s27 = ssub.s32 %s22, 1
      %s28 = ssub.s32 %s22, 2
      %s35 = sadd.s32 1, %s30
      %p36 = scmp.ge.s32.totalorder %s35, 1
      %s37 = scalar_select %p36, 0, %s35
      %s38 = sadd.s32 1, %s29
      %s39 = scalar_select %p36, %s38, %s29
      %p40 = scmp.ge.s32.totalorder %s39, 2
      %s41 = scalar_select %p40, 0, %s39
      %s42 = ssub.s32 %s29, %s41
      %s43 = ssub.s32 %s30, %s37
      %s44 = sor.u32 %s42, %s43
      %p45 = scmp.eq.s32.totalorder %s44, 0
      %s47 = sadd.s32 %s46, 1
      %s48 = scalar_select %p45, %s46, %s47
      %p51 = pneg %p45
      %p52 = scmp.eq.s32.totalorder %s22, 1
      %p53 = por %p51, %p52
      %p54 = scmp.ne.s32.totalorder %s46, %s49
      %p55 = scmp.eq.s32.totalorder %s22, 0
      %p56 = por %p54, %p55
      %p57 = scmp.ne.s32.totalorder %s46, %s49
      %p58 = scmp.eq.s32.totalorder %s27, 1
      %p59 = por %p57, %p58
      %p60 = scmp.ne.s32.totalorder %s49, %s50
      %p61 = scmp.eq.s32.totalorder %s27, 0
      %p62 = por %p60, %p61
      %p63 = scmp.ne.s32.totalorder %s49, %s50
      %p64 = scmp.eq.s32.totalorder %s28, 1
      %p65 = por %p63, %p64
      %p67 = scmp.ne.s32.totalorder %s50, %s66
      %p68 = scmp.eq.s32.totalorder %s28, 0
      %p69 = por %p67, %p68
      %s70 = ssub.s32 %s29, %s41
      %s71 = ssub.s32 %s30, %s37
      %s72 = sor.u32 %s70, %s71
      %p73 = scmp.eq.s32.totalorder %s72, 0
      %s75 = sadd.s32 %s74, 1
      %s76 = scalar_select %p73, %s74, %s75
      %p79 = pneg %p73
      %p80 = scmp.eq.s32.totalorder %s22, 1
      %p81 = por %p79, %p80
      %p82 = scmp.ne.s32.totalorder %s74, %s77
      %p83 = scmp.eq.s32.totalorder %s22, 0
      %p84 = por %p82, %p83
      %p85 = scmp.ne.s32.totalorder %s74, %s77
      %p86 = scmp.eq.s32.totalorder %s27, 1
      %p87 = por %p85, %p86
      %p88 = scmp.ne.s32.totalorder %s77, %s78
      %p89 = scmp.eq.s32.totalorder %s27, 0
      %p90 = por %p88, %p89
      %p91 = scmp.ne.s32.totalorder %s77, %s78
      %p92 = scmp.eq.s32.totalorder %s28, 1
      %p93 = por %p91, %p92
      %p95 = scmp.ne.s32.totalorder %s78, %s94
      %p96 = scmp.eq.s32.totalorder %s28, 0
      %p97 = por %p95, %p96
      %s99 = sadd.s32 %s98, 1
      %p102 = scmp.eq.s32.totalorder %s22, 1
      %p103 = scmp.ne.s32.totalorder %s98, %s100
      %p104 = scmp.eq.s32.totalorder %s22, 0
      %p105 = por %p103, %p104
      %p106 = scmp.ne.s32.totalorder %s98, %s100
      %p107 = scmp.eq.s32.totalorder %s27, 1
      %p108 = por %p106, %p107
      %p109 = scmp.ne.s32.totalorder %s100, %s101
      %p110 = scmp.eq.s32.totalorder %s27, 0
      %p111 = por %p109, %p110
      %p112 = scmp.ne.s32.totalorder %s100, %s101
      %p113 = scmp.eq.s32.totalorder %s28, 1
      %p114 = por %p112, %p113
      %p116 = scmp.ne.s32.totalorder %s101, %s115
      %p117 = scmp.eq.s32.totalorder %s28, 0
      %p118 = por %p116, %p117
      %s120 = sadd.s32 %s119, 1
      %p123 = scmp.eq.s32.totalorder %s22, 1
      %p124 = scmp.ne.s32.totalorder %s119, %s121
      %p125 = scmp.eq.s32.totalorder %s22, 0
      %p126 = por %p124, %p125
      %p127 = scmp.ne.s32.totalorder %s119, %s121
      %p128 = scmp.eq.s32.totalorder %s27, 1
      %p129 = por %p127, %p128
      %p130 = scmp.ne.s32.totalorder %s121, %s122
      %p131 = scmp.eq.s32.totalorder %s27, 0
      %p132 = por %p130, %p131
      %p133 = scmp.ne.s32.totalorder %s121, %s122
      %p134 = scmp.eq.s32.totalorder %s28, 1
      %p135 = por %p133, %p134
      %p137 = scmp.ne.s32.totalorder %s122, %s136
      %p138 = scmp.eq.s32.totalorder %s28, 0
      %p139 = por %p137, %p138
      %s141 = sadd.s32 %s140, 1
      %p144 = scmp.eq.s32.totalorder %s22, 1
      %p145 = scmp.ne.s32.totalorder %s140, %s142
      %p146 = scmp.eq.s32.totalorder %s22, 0
      %p147 = por %p145, %p146
      %p148 = scmp.ne.s32.totalorder %s140, %s142
      %p149 = scmp.eq.s32.totalorder %s27, 1
      %p150 = por %p148, %p149
      %p151 = scmp.ne.s32.totalorder %s142, %s143
      %p152 = scmp.eq.s32.totalorder %s27, 0
      %p153 = por %p151, %p152
      %p154 = scmp.ne.s32.totalorder %s142, %s143
      %p155 = scmp.eq.s32.totalorder %s28, 1
      %p156 = por %p154, %p155
      %p158 = scmp.ne.s32.totalorder %s143, %s157
      %p159 = scmp.eq.s32.totalorder %s28, 0
      %p160 = por %p158, %p159
      %s162 = sadd.s32 %s161, 1
      %p165 = scmp.eq.s32.totalorder %s22, 1
      %p166 = scmp.ne.s32.totalorder %s161, %s163
      %p167 = scmp.eq.s32.totalorder %s22, 0
      %p168 = por %p166, %p167
      %p169 = scmp.ne.s32.totalorder %s161, %s163
      %p170 = scmp.eq.s32.totalorder %s27, 1
      %p171 = por %p169, %p170
      %p172 = scmp.ne.s32.totalorder %s163, %s164
      %p173 = scmp.eq.s32.totalorder %s27, 0
      %p174 = por %p172, %p173
      %p175 = scmp.ne.s32.totalorder %s163, %s164
      %p176 = scmp.eq.s32.totalorder %s28, 1
      %p177 = por %p175, %p176
      %p179 = scmp.ne.s32.totalorder %s164, %s178
      %p180 = scmp.eq.s32.totalorder %s28, 0
      %p181 = por %p179, %p180
      %s182 = ssub.s32 %s29, %s41
      %s183 = ssub.s32 %s30, %s37
      %s184 = sor.u32 %s182, %s183
      %p185 = scmp.eq.s32.totalorder %s184, 0
      %s187 = sadd.s32 %s186, 1
      %s188 = scalar_select %p185, %s186, %s187
      %p191 = pneg %p185
      %p192 = scmp.eq.s32.totalorder %s22, 1
      %p193 = por %p191, %p192
      %p194 = scmp.ne.s32.totalorder %s186, %s189
      %p195 = scmp.eq.s32.totalorder %s22, 0
      %p196 = por %p194, %p195
      %p197 = scmp.ne.s32.totalorder %s186, %s189
      %p198 = scmp.eq.s32.totalorder %s27, 1
      %p199 = por %p197, %p198
      %p200 = scmp.ne.s32.totalorder %s189, %s190
      %p201 = scmp.eq.s32.totalorder %s27, 0
      %p202 = por %p200, %p201
      %p203 = scmp.ne.s32.totalorder %s189, %s190
      %p204 = scmp.eq.s32.totalorder %s28, 1
      %p205 = por %p203, %p204
      %p207 = scmp.ne.s32.totalorder %s190, %s206
      %p208 = scmp.eq.s32.totalorder %s28, 0
      %p209 = por %p207, %p208
      %p210 = scmp.le.s32.totalorder 1, %s22
      %p211 = scmp.lt.s32.totalorder %s22, 3
      %p212 = pnand %p210, %p211
      %p213 = pneg %p212
      // Predicated region
      $region9: #{tpu_custom_call.1} parent=5 // pred_check
        _
      $region10: #{tpu_custom_call.1} parent=5 // pred_check_branch
        %215 = sbr.rel (%p212) target = $region12
      $region11: #{tpu_custom_call.1} parent=5 // pred_region
        %s216 = ssub.s32 %s22, 1
        // Predicated region
        $region13: #{tpu_custom_call.1} parent=11 // pred_check
          %p217 = pneg %p111
        $region14: #{tpu_custom_call.1} parent=11 // pred_check_branch
          %219 = sbr.rel (%p217) target = $region16
        $region15: #{tpu_custom_call.1} parent=11 // pred_region
          _
        $region16: #{tpu_custom_call.1} parent=11 // pred_fallthru
          _
        // Predicated region
        $region17: #{tpu_custom_call.1} parent=11 // pred_check
          %p220 = pneg %p132
        $region18: #{tpu_custom_call.1} parent=11 // pred_check_branch
          %222 = sbr.rel (%p220) target = $region20
        $region19: #{tpu_custom_call.1} parent=11 // pred_region
          %224 = vsyncadd [#allocation6], 0
          %s226 = sshll.u32 %s3, 4
          %s227 = int_to_ptr.hbm [resolvable:$true] %s226
          %s228 = sshll.u32 [#allocation7], 4
          %s229 = int_to_ptr.vmem [resolvable:$true] %s228
          %231 = dma.hbm_to_vmem [thread:$0]  %s227, 64, %s229, [#allocation6]
        $region20: #{tpu_custom_call.1} parent=11 // pred_fallthru
          _
        // Predicated region
        $region21: #{tpu_custom_call.1} parent=11 // pred_check
          %p232 = pneg %p153
        $region22: #{tpu_custom_call.1} parent=11 // pred_check_branch
          %234 = sbr.rel (%p232) target = $region24
        $region23: #{tpu_custom_call.1} parent=11 // pred_region
          %236 = vsyncadd [#allocation9], 0
          %s238 = sshll.u32 %s4, 4
          %s239 = int_to_ptr.hbm [resolvable:$true] %s238
          %s240 = sshll.u32 [#allocation8], 4
          %s241 = int_to_ptr.vmem [resolvable:$true] %s240
          %243 = dma.hbm_to_vmem [thread:$0]  %s239, 64, %s241, [#allocation9]
        $region24: #{tpu_custom_call.1} parent=11 // pred_fallthru
          _
        // Predicated region
        $region25: #{tpu_custom_call.1} parent=11 // pred_check
          %p244 = pneg %p174
        $region26: #{tpu_custom_call.1} parent=11 // pred_check_branch
          %246 = sbr.rel (%p244) target = $region28
        $region27: #{tpu_custom_call.1} parent=11 // pred_region
          _
        $region28: #{tpu_custom_call.1} parent=11 // pred_fallthru
          _
      $region12: #{tpu_custom_call.1} parent=5 // pred_fallthru
        _
      %p247 = scmp.lt.s32.totalorder %s22, 2
      // Predicated region
      $region29: #{tpu_custom_call.1} parent=5 // pred_check
        %p248 = pneg %p247
      $region30: #{tpu_custom_call.1} parent=5 // pred_check_branch
        %250 = sbr.rel (%p248) target = $region32
      $region31: #{tpu_custom_call.1} parent=5 // pred_region
        // Predicated region
        $region33: #{tpu_custom_call.1} parent=31 // pred_check
          %p251 = pneg %p56
        $region34: #{tpu_custom_call.1} parent=31 // pred_check_branch
          %253 = sbr.rel (%p251) target = $region36
        $region35: #{tpu_custom_call.1} parent=31 // pred_region
          %s254 = sand.u32 %s46, 1
          %s255 = scalar_lea.sflag [#allocation3], %s254
          %s256 = sand.u32 %s46, 1
          %s257 = smul.addr %s256, 8
          %s258 = scalar_lea.vmem [#allocation2], %s257
          %s259 = smul.u32 2, %s30
          %261 = vsyncadd %s255, 0
          %s262 = smul.addr %s29, 2
          %s263 = sadd.s32 %s259, %s262
          %s264 = smul.addr %s263, 4
          %s265 = scalar_lea.hbm %s0, %s264
          %s267 = sshll.u32 %s265, 4
          %s268 = int_to_ptr.hbm [resolvable:$true] %s267
          %s269 = sshll.u32 %s258, 4
          %s270 = int_to_ptr.vmem [resolvable:$true] %s269
          %272 = dma.hbm_to_vmem [thread:$0]  %s268, 128, %s270, %s255
        $region36: #{tpu_custom_call.1} parent=31 // pred_fallthru
          _
        // Predicated region
        $region37: #{tpu_custom_call.1} parent=31 // pred_check
          %p273 = pneg %p84
        $region38: #{tpu_custom_call.1} parent=31 // pred_check_branch
          %275 = sbr.rel (%p273) target = $region40
        $region39: #{tpu_custom_call.1} parent=31 // pred_region
          %s276 = sand.u32 %s22, 1
          %s277 = scalar_lea.sflag [#allocation6], %s276
          %s278 = sand.u32 %s74, 1
          %s279 = smul.addr %s278, 8
          %s280 = scalar_lea.vmem [#allocation5], %s279
          %s281 = smul.u32 2, %s30
          %283 = vsyncadd %s277, 0
          %s284 = smul.addr %s29, 2
          %s285 = sadd.s32 %s281, %s284
          %s286 = smul.addr %s285, 4
          %s287 = scalar_lea.hbm %s1, %s286
          %s289 = sshll.u32 %s287, 4
          %s290 = int_to_ptr.hbm [resolvable:$true] %s289
          %s291 = sshll.u32 %s280, 4
          %s292 = int_to_ptr.vmem [resolvable:$true] %s291
          %294 = dma.hbm_to_vmem [thread:$0]  %s290, 128, %s292, %s277
        $region40: #{tpu_custom_call.1} parent=31 // pred_fallthru
          _
      $region32: #{tpu_custom_call.1} parent=5 // pred_fallthru
        _
      %p295 = scmp.le.s32.totalorder 1, %s22
      %p296 = scmp.lt.s32.totalorder %s22, 3
      %p297 = pnand %p295, %p296
      %p298 = pneg %p297
      // Predicated region
      $region41: #{tpu_custom_call.1} parent=5 // pred_check
        _
      $region42: #{tpu_custom_call.1} parent=5 // pred_check_branch
        %300 = sbr.rel (%p297) target = $region44
      $region43: #{tpu_custom_call.1} parent=5 // pred_region
        %s301 = ssub.s32 %s22, 1
        %s302 = sand.u32 %s49, 1
        %s303 = scalar_lea.sflag [#allocation3], %s302
        %s304 = sand.u32 %s49, 1
        %s305 = smul.addr %s304, 8
        %s306 = scalar_lea.vmem [#allocation2], %s305
        // Predicated region
        $region45: #{tpu_custom_call.1} parent=43 // pred_check
          %p307 = pneg %p62
        $region46: #{tpu_custom_call.1} parent=43 // pred_check_branch
          %309 = sbr.rel (%p307) target = $region48
        $region47: #{tpu_custom_call.1} parent=43 // pred_region
          %311 = dma.done %s303, 128
        $region48: #{tpu_custom_call.1} parent=43 // pred_fallthru
          _
        %s312 = sand.u32 %s27, 1
        %s313 = scalar_lea.sflag [#allocation6], %s312
        %s314 = sand.u32 %s77, 1
        %s315 = smul.addr %s314, 8
        %s316 = scalar_lea.vmem [#allocation5], %s315
        // Predicated region
        $region49: #{tpu_custom_call.1} parent=43 // pred_check
          %p317 = pneg %p90
        $region50: #{tpu_custom_call.1} parent=43 // pred_check_branch
          %319 = sbr.rel (%p317) target = $region52
        $region51: #{tpu_custom_call.1} parent=43 // pred_region
          %321 = dma.done %s313, 128
        $region52: #{tpu_custom_call.1} parent=43 // pred_fallthru
          _
        // Predicated region
        $region53: #{tpu_custom_call.1} parent=43 // pred_check
          %p322 = pneg %p132
        $region54: #{tpu_custom_call.1} parent=43 // pred_check_branch
          %324 = sbr.rel (%p322) target = $region56
        $region55: #{tpu_custom_call.1} parent=43 // pred_region
          %326 = dma.done [#allocation6], 64
        $region56: #{tpu_custom_call.1} parent=43 // pred_fallthru
          _
        // Predicated region
        $region57: #{tpu_custom_call.1} parent=43 // pred_check
          %p327 = pneg %p153
        $region58: #{tpu_custom_call.1} parent=43 // pred_check_branch
          %329 = sbr.rel (%p327) target = $region60
        $region59: #{tpu_custom_call.1} parent=43 // pred_region
          %331 = dma.done [#allocation9], 64
        $region60: #{tpu_custom_call.1} parent=43 // pred_fallthru
          _
        %s332 = sand.u32 %s49, 1
        %s333 = scalar_lea.sflag [#allocation3], %s332
        %s334 = sand.u32 %s49, 1
        %s335 = smul.addr %s334, 8
        %s336 = scalar_lea.vmem [#allocation2], %s335
        %p337 = pneg %p62
        %p338 = pneg %p59
        %s339 = sand.u32 %s27, 1
        %s340 = scalar_lea.sflag [#allocation6], %s339
        %s341 = sand.u32 %s77, 1
        %s342 = smul.addr %s341, 8
        %s343 = scalar_lea.vmem [#allocation5], %s342
        %p344 = pneg %p90
        %p345 = pneg %p87
        %p346 = pneg %p111
        %p347 = pneg %p108
        %p348 = pneg %p132
        %p349 = pneg %p129
        %p350 = pneg %p153
        %p351 = pneg %p150
        %p352 = pneg %p174
        %p353 = pneg %p171
        %p354 = pneg %p202
        %p355 = pneg %p199
        %s356 = sand.u32 %s189, 1
        %s357 = scalar_lea.sflag [#allocation4], %s356
        %s358 = sand.u32 %s189, 1
        %s359 = smul.addr %s358, 8
        %s360 = scalar_lea.vmem [#allocation10], %s359
        %s361 = smul.u32 2, %s32
        %s362 = smul.u32 2, %s32
        %s363 = smul.u32 2, %s32
        %v364 = vld [vmem:[%s306] sm:$0xff]
        %v365 = vld [vmem:[%s316] sm:$0xff]
        %v366 = vld [vmem:[%s2] sm:$0xf]
        %v367 = vld [vmem:[#allocation7] sm:$0xf]
        %v368 = vld [vmem:[#allocation8] sm:$0xf]
        %v369 = vld [vmem:[%s5] sm:$0xf]
        %371 = vst [vmem:[#allocation1] ss:$2 sm:$0xff] %v365
        %v372 = vld.sshfl [vmem:[#allocation1] sm:$0xff pattern:$0x75316420]
        %v373 = vld.sshfl [vmem:[#allocation1 + $0x8] sm:$0xff pattern:$0x75316420]
        %vm374 = vcmask 31744
        %v376 = vsel %vm374, %v367, 0
        %vm378 = vcmask 1043456
        %v379 = vsel %vm378, %v372, 0
        %v381 = vsel %vm378, %v373, 0
        %383 = vmatpush.msra.mxu0 0.0
        %384 = vmatpush.msra.mxu0 0.0
        %385 = vmatpush.msra.mxu0 0.0
        %386 = vmatpush.msra.mxu0 0.0
        %387 = vmatpush.msra.mxu0 0.0
        %388 = vmatpush.msra.mxu0 0.0
        %389 = vmatpush.msra.mxu0 0.0
        %390 = vmatpush.msra.mxu0 0.0
        %391 = vmatpush.msra.mxu0 0.0
        %392 = vmatpush.msra.mxu0 0.0
        %393 = vmatpush.msra.mxu0 0.0
        %394 = vmatpush.msra.mxu0 0.0
        %395 = vmatpush.msra.mxu0 0.0
        %396 = vmatpush.msra.mxu0 0.0
        %397 = vmatpush.msra.mxu0 0.0
        %398 = vmatpush.msra.mxu0 %v379
        %399 = vmatmul.f32.gmra.mxu0 %v376
        %v400 = vpop.f32.mrf.mxu0
        %v401 = vadd.f32 0.0, %v400
        %402 = vdwg.mxu0
        %403 = vmatpush.msra.mxu0 0.0
        %404 = vmatpush.msra.mxu0 0.0
        %405 = vmatpush.msra.mxu0 0.0
        %406 = vmatpush.msra.mxu0 0.0
        %407 = vmatpush.msra.mxu0 0.0
        %408 = vmatpush.msra.mxu0 0.0
        %409 = vmatpush.msra.mxu0 0.0
        %410 = vmatpush.msra.mxu0 0.0
        %411 = vmatpush.msra.mxu0 0.0
        %412 = vmatpush.msra.mxu0 0.0
        %413 = vmatpush.msra.mxu0 0.0
        %414 = vmatpush.msra.mxu0 0.0
        %415 = vmatpush.msra.mxu0 0.0
        %416 = vmatpush.msra.mxu0 0.0
        %417 = vmatpush.msra.mxu0 0.0
        %418 = vmatpush.msra.mxu0 %v381
        %419 = vmatmul.f32.gmra.mxu0 %v376
        %v420 = vpop.f32.mrf.mxu0
        %v421 = vadd.f32 0.0, %v420
        %422 = vdwg.mxu0
        %424 = vst [vmem:[#allocation1] ss:$2 sm:$0xff] %v364
        %v425 = vld.sshfl [vmem:[#allocation1] sm:$0xff pattern:$0x75316420]
        %v426 = vld.sshfl [vmem:[#allocation1 + $0x8] sm:$0xff pattern:$0x75316420]
        %v428 = vsel %vm374, %v366, 0
        %v430 = vsel %vm378, %v425, 0
        %v432 = vsel %vm378, %v426, 0
        %434 = vmatpush.msra.mxu0 0.0
        %435 = vmatpush.msra.mxu0 0.0
        %436 = vmatpush.msra.mxu0 0.0
        %437 = vmatpush.msra.mxu0 0.0
        %438 = vmatpush.msra.mxu0 0.0
        %439 = vmatpush.msra.mxu0 0.0
        %440 = vmatpush.msra.mxu0 0.0
        %441 = vmatpush.msra.mxu0 0.0
        %442 = vmatpush.msra.mxu0 0.0
        %443 = vmatpush.msra.mxu0 0.0
        %444 = vmatpush.msra.mxu0 0.0
        %445 = vmatpush.msra.mxu0 0.0
        %446 = vmatpush.msra.mxu0 0.0
        %447 = vmatpush.msra.mxu0 0.0
        %448 = vmatpush.msra.mxu0 0.0
        %449 = vmatpush.msra.mxu0 %v430
        %450 = vmatmul.f32.gmra.mxu0 %v428
        %v451 = vpop.f32.mrf.mxu0
        %v452 = vadd.f32 %v401, %v451
        %453 = vdwg.mxu0
        %454 = vmatpush.msra.mxu0 0.0
        %455 = vmatpush.msra.mxu0 0.0
        %456 = vmatpush.msra.mxu0 0.0
        %457 = vmatpush.msra.mxu0 0.0
        %458 = vmatpush.msra.mxu0 0.0
        %459 = vmatpush.msra.mxu0 0.0
        %460 = vmatpush.msra.mxu0 0.0
        %461 = vmatpush.msra.mxu0 0.0
        %462 = vmatpush.msra.mxu0 0.0
        %463 = vmatpush.msra.mxu0 0.0
        %464 = vmatpush.msra.mxu0 0.0
        %465 = vmatpush.msra.mxu0 0.0
        %466 = vmatpush.msra.mxu0 0.0
        %467 = vmatpush.msra.mxu0 0.0
        %468 = vmatpush.msra.mxu0 0.0
        %469 = vmatpush.msra.mxu0 %v432
        %470 = vmatmul.f32.gmra.mxu0 %v428
        %v471 = vpop.f32.mrf.mxu0
        %v472 = vadd.f32 %v421, %v471
        %473 = vdwg.mxu0
        %475 = vset.pattern.permute.xlu0 0
        %476 = vperm.xlu0 %475, %v369
        %v477 = vpop.permute.xlu0 %476
        %v479 = vadd.f32 %v452, %v477
        %v480 = vadd.f32 %v472, %v477
        %v481 = vmax.f32 %v479, 0.0
        %v482 = vmax.f32 %v480, 0.0
        %v484 = vsel %vm374, %v368, 0
        %v487 = vsel %vm378, %v481, 0
        %v490 = vsel %vm378, %v482, 0
        %492 = vmatpush.msra.mxu0 0.0
        %493 = vmatpush.msra.mxu0 0.0
        %494 = vmatpush.msra.mxu0 0.0
        %495 = vmatpush.msra.mxu0 0.0
        %496 = vmatpush.msra.mxu0 0.0
        %497 = vmatpush.msra.mxu0 0.0
        %498 = vmatpush.msra.mxu0 0.0
        %499 = vmatpush.msra.mxu0 0.0
        %500 = vmatpush.msra.mxu0 0.0
        %501 = vmatpush.msra.mxu0 0.0
        %502 = vmatpush.msra.mxu0 0.0
        %503 = vmatpush.msra.mxu0 0.0
        %504 = vmatpush.msra.mxu0 0.0
        %505 = vmatpush.msra.mxu0 0.0
        %506 = vmatpush.msra.mxu0 0.0
        %507 = vmatpush.msra.mxu0 %v487
        %508 = vmatmul.f32.gmra.mxu0 %v484
        %v509 = vpop.f32.mrf.mxu0
        %v510 = vadd.f32 0.0, %v509
        %511 = vdwg.mxu0
        %512 = vmatpush.msra.mxu0 0.0
        %513 = vmatpush.msra.mxu0 0.0
        %514 = vmatpush.msra.mxu0 0.0
        %515 = vmatpush.msra.mxu0 0.0
        %516 = vmatpush.msra.mxu0 0.0
        %517 = vmatpush.msra.mxu0 0.0
        %518 = vmatpush.msra.mxu0 0.0
        %519 = vmatpush.msra.mxu0 0.0
        %520 = vmatpush.msra.mxu0 0.0
        %521 = vmatpush.msra.mxu0 0.0
        %522 = vmatpush.msra.mxu0 0.0
        %523 = vmatpush.msra.mxu0 0.0
        %524 = vmatpush.msra.mxu0 0.0
        %525 = vmatpush.msra.mxu0 0.0
        %526 = vmatpush.msra.mxu0 0.0
        %527 = vmatpush.msra.mxu0 %v490
        %528 = vmatmul.f32.gmra.mxu0 %v484
        %v529 = vpop.f32.mrf.mxu0
        %v530 = vadd.f32 0.0, %v529
        %531 = vdwg.mxu0
        %532 = vst [vmem:[#allocation1] ss:$2 sm:$0xff] %v364
        %v533 = vld.sshfl [vmem:[#allocation1] sm:$0xff pattern:$0x75316420]
        %v534 = vld.sshfl [vmem:[#allocation1 + $0x8] sm:$0xff pattern:$0x75316420]
        %v537 = vmul.f32 %v510, %v533
        %v538 = vmul.f32 %v530, %v534
        %v541 = vrot.slane %v538, 4
        %v542 = vsel %vm378, %v537, %v541
        %544 = vst [vmem:[%s360] sm:$0xff] %v542
        %s545 = sand.u32 %s189, 1
        %s546 = scalar_lea.sflag [#allocation4], %s545
        %s547 = sand.u32 %s189, 1
        %s548 = smul.addr %s547, 8
        %s549 = scalar_lea.vmem [#allocation10], %s548
        // Predicated region
        $region61: #{tpu_custom_call.1} parent=43 // pred_check
          %p550 = pneg %p199
        $region62: #{tpu_custom_call.1} parent=43 // pred_check_branch
          %552 = sbr.rel (%p550) target = $region64
        $region63: #{tpu_custom_call.1} parent=43 // pred_region
          %s553 = smul.u32 2, %s32
          %555 = vsyncadd %s546, 0
          %s556 = smul.addr %s31, 2
          %s557 = sadd.s32 %s553, %s556
          %s558 = smul.addr %s557, 4
          %s559 = scalar_lea.hbm %s6, %s558
          %s561 = sshll.u32 %s549, 4
          %s562 = int_to_ptr.vmem [resolvable:$true] %s561
          %s563 = sshll.u32 %s559, 4
          %s564 = int_to_ptr.hbm [resolvable:$true] %s563
          %566 = dma.vmem_to_hbm [thread:$0]  %s562, 128, %s564, %s546
        $region64: #{tpu_custom_call.1} parent=43 // pred_fallthru
          _
      $region44: #{tpu_custom_call.1} parent=5 // pred_fallthru
        _
      %p567 = scmp.le.s32.totalorder 2, %s22
      // Predicated region
      $region65: #{tpu_custom_call.1} parent=5 // pred_check
        %p568 = pneg %p567
      $region66: #{tpu_custom_call.1} parent=5 // pred_check_branch
        %570 = sbr.rel (%p568) target = $region68
      $region67: #{tpu_custom_call.1} parent=5 // pred_region
        %s571 = ssub.s32 %s22, 2
        // Predicated region
        $region69: #{tpu_custom_call.1} parent=67 // pred_check
          %p572 = pneg %p205
        $region70: #{tpu_custom_call.1} parent=67 // pred_check_branch
          %574 = sbr.rel (%p572) target = $region72
        $region71: #{tpu_custom_call.1} parent=67 // pred_region
          %s575 = sand.u32 %s190, 1
          %s576 = scalar_lea.sflag [#allocation4], %s575
          %s577 = sand.u32 %s190, 1
          %s578 = smul.addr %s577, 8
          %s579 = scalar_lea.vmem [#allocation10], %s578
          %581 = dma.done %s576, 128
        $region72: #{tpu_custom_call.1} parent=67 // pred_fallthru
          _
      $region68: #{tpu_custom_call.1} parent=5 // pred_fallthru
        _
    $region6: #{tpu_custom_call.1} parent=1 // loop_footer
      %s26 = sadd.s32 1, %s22
    $region7: #{tpu_custom_call.1} parent=1 // loop_footer_branch
      %21 = sbr.rel target = $region3
    $region8: #{tpu_custom_call.1} parent=1 // loop_exit
      _
    %582 = vsyncpa [#allocation3], 1
    %s583 = scalar_lea.sflag [#allocation3], 1
    %584 = vsyncpa %s583, 1
    %585 = vsyncpa [#allocation6], 1
    %s586 = scalar_lea.sflag [#allocation6], 1
    %587 = vsyncpa %s586, 1
    %588 = vsyncpa [#allocation9], 1
    %589 = vsyncpa [#allocation4], 1
    %s590 = scalar_lea.sflag [#allocation4], 1
    %591 = vsyncpa %s590, 1

</llo_original>
